<compile_context>
chip_gen: v7x
topology: tpu7x:2x2x1
jax: 0.10.0
libtpu: 0.0.40
codegen_flags: <defaults>
</compile_context>

<pallas_src>
import jax
import jax.numpy as jnp
from jax.experimental import pallas as pl
from jax.experimental.pallas import tpu as pltpu

_LANE = 128
_SUBLANE = {4: 8, 2: 16, 1: 32}  # native sublane packing per itemsize


def _gegelu_kernel(scale_ref, x_ref, o_ref):
    # scale_ref: (1,) f32 in SMEM ; x_ref / o_ref: (block_rows, block_width) VMEM tiles.
    x = x_ref[...]
    s = scale_ref[0].astype(x.dtype)
    # x * sigmoid(s*x) == x / (1 + exp(-s*x)); exp -> EUP slot, compute in input dtype.
    # (If the single divide ever binds on v7x bf16, it can become
    #  pl.reciprocal(1 + e, approx=True); exact divide keeps f32 bit-faithful here.)
    o_ref[...] = (x / (1.0 + jnp.exp(-(s * x)))).astype(o_ref.dtype)


def _vmem_budget():
    """(vmem_limit_bytes, target_block_bytes) sized for the current TPU generation."""
    try:
        cap = pltpu.get_tpu_info().vmem_capacity_bytes
    except Exception:
        cap = 64 << 20  # conservative default (v7x per-core VMEM)
    vmem_limit = max(16 << 20, min(cap // 2, 32 << 20))
    # in + out, double-buffered -> ~4x block bytes resident; keep 2x headroom.
    target_block_bytes = vmem_limit // 8
    return vmem_limit, target_block_bytes


def _pick_layout(n, dtype, target_block_bytes):
    """(rows, width, block_rows, block_width) for a lane-dense 2-D slab of n elements."""
    itemsize = jnp.dtype(dtype).itemsize
    sub = _SUBLANE.get(itemsize, 8)
    total = n * itemsize
    width = next((w for w in (2048, 1024, 512, 256, 128) if n % w == 0), None)

    if width is None:
        # Ragged element count: lane-major (1, n) slab; the partial tail block is
        # clamped by Pallas, so no pad/slice HBM passes are needed.
        # TODO(synk): sublane dim of 1 underutilizes VMEM tiles; acceptable fallback.
        if total <= (1 << 20):
            return 1, n, 1, n
        by_bytes = (target_block_bytes // itemsize) // 1024
        by_steps = pl.cdiv(pl.cdiv(n, 8), 1024)
        return 1, n, 1, max(1024, min(by_bytes, by_steps) * 1024)

    rows = n // width
    if total <= (1 << 20) or rows <= sub:
        return rows, width, rows, width  # small tensor: single block is cheapest
    # >= ~8 grid steps for DMA/compute overlap (and 2-TC split on v7x), capped by the
    # per-block VMEM budget.
    rows_by_bytes = max(sub, target_block_bytes // (width * itemsize))
    rows_by_steps = max(sub, pl.cdiv(rows, 8))
    block_rows = min(rows, rows_by_bytes, rows_by_steps)
    block_rows = max(sub, (block_rows // sub) * sub)
    return rows, width, block_rows, width


def gegelu(x, scale):
    """x * sigmoid(scale * x), matching GeGeLU.forward."""
    orig_shape = x.shape
    dtype = x.dtype
    n = x.size
    vmem_limit, target_block_bytes = _vmem_budget()
    rows, width, block_rows, block_width = _pick_layout(n, dtype, target_block_bytes)

    x2d = x.reshape(rows, width)
    scale_arr = jnp.asarray(scale, jnp.float32).reshape(1)

    grid = (pl.cdiv(rows, block_rows), pl.cdiv(width, block_width))
    tile = pl.BlockSpec((block_rows, block_width), lambda i, j: (i, j))

    out2d = pl.pallas_call(
        _gegelu_kernel,
        out_shape=jax.ShapeDtypeStruct((rows, width), dtype),
        grid_spec=pltpu.PrefetchScalarGridSpec(
            num_scalar_prefetch=0,
            grid=grid,
            in_specs=[
                pl.BlockSpec(memory_space=pltpu.SMEM),  # scale (1,) scalar
                tile,                                   # x tile
            ],
            out_specs=tile,
        ),
        compiler_params=pltpu.CompilerParams(
            dimension_semantics=("parallel", "parallel"),
            vmem_limit_bytes=vmem_limit,
        ),
    )(scale_arr, x2d)

    return out2d.reshape(orig_shape)


if __name__ == "__main__":
    key = jax.random.PRNGKey(0)
    k1, k2, k3, k4 = jax.random.split(key, 4)

    # deterministic parameter init, matching nn.Parameter(torch.tensor(1.0))
    scale = jnp.float32(1.0)

    def ref_fn(x, s):
        return x * jax.nn.sigmoid(s * x)

    # 1) NCHW f32 input as PyTorch would see it (2*4*16*16 = 2048 -> single lane-dense block)
    x1 = jax.random.normal(k1, (2, 4, 16, 16), dtype=jnp.float32)
    o1 = jax.block_until_ready(gegelu(x1, scale))
    assert o1.shape == x1.shape and o1.dtype == x1.dtype
    assert jnp.allclose(o1, ref_fn(x1, scale), atol=1e-5, rtol=1e-5)

    # 2) bf16 input: native narrow-dtype compute path (v6e/v7x bf16 VPU/EUP)
    x2 = jax.random.normal(k2, (2, 4, 16, 16), dtype=jnp.float32).astype(jnp.bfloat16)
    o2 = jax.block_until_ready(gegelu(x2, scale))
    assert o2.shape == x2.shape and o2.dtype == jnp.bfloat16
    ref2 = ref_fn(x2.astype(jnp.float32), scale)
    assert jnp.allclose(o2.astype(jnp.float32), ref2, atol=5e-2, rtol=5e-2)

    # 3) >1 MiB f32 tensor: multi-step pipelined grid with a clamped partial tail block
    x3 = jax.random.normal(k3, (17, 8, 32, 64), dtype=jnp.float32)
    o3 = jax.block_until_ready(gegelu(x3, scale))
    assert o3.shape == x3.shape
    assert jnp.allclose(o3, ref_fn(x3, scale), atol=1e-5, rtol=1e-5)

    # 4) ragged size (not a multiple of 128): (1, n) slab, no pad / slice passes
    x4 = jax.random.normal(k4, (3, 5, 7), dtype=jnp.float32)
    o4 = jax.block_until_ready(gegelu(x4, scale))
    assert o4.shape == x4.shape
    assert jnp.allclose(o4, ref_fn(x4, scale), atol=1e-5, rtol=1e-5)

    print("KERNEL_OK")
</pallas_src>

<mosaic_0001>
module attributes {stable_mosaic.version = 11 : i64} {
  func.func @_gegelu_kernel(%arg0: i32, %arg1: i32, %arg2: memref<1xf32, #tpu.memory_space<smem>>, %arg3: memref<1x2048xf32, #tpu.memory_space<vmem>>, %arg4: memref<1x2048xf32, #tpu.memory_space<vmem>>) attributes {dimension_semantics = [#tpu.dimension_semantics<parallel>, #tpu.dimension_semantics<parallel>], iteration_bounds = array<i64: 1, 1>, scalar_prefetch = 0 : i64, scratch_operands = 0 : i64, tpu.core_type = #tpu.core_type<tc>, window_params = [{transform_indices = @transform_0, window_bounds = array<i64: 1>}, {transform_indices = @transform_1, window_bounds = array<i64: 1, 2048>}, {transform_indices = @transform_2, window_bounds = array<i64: 1, 2048>}]} {
    %c0 = arith.constant 0 : index
    %c0_0 = arith.constant 0 : index
    %0 = vector.load %arg3[%c0, %c0_0] : memref<1x2048xf32, #tpu.memory_space<vmem>>, vector<1x2048xf32>
    %c0_1 = arith.constant 0 : index
    %1 = memref.load %arg2[%c0_1] : memref<1xf32, #tpu.memory_space<smem>>
    %2 = vector.broadcast %1 : f32 to vector<1x2048xf32>
    %3 = arith.mulf %2, %0 : vector<1x2048xf32>
    %cst = arith.constant 0.000000e+00 : f32
    %4 = vector.broadcast %cst : f32 to vector<1x2048xf32>
    %5 = arith.subf %4, %3 : vector<1x2048xf32>
    %6 = math.exp %5 : vector<1x2048xf32>
    %cst_2 = arith.constant 1.000000e+00 : f32
    %7 = vector.broadcast %cst_2 : f32 to vector<1x2048xf32>
    %8 = arith.addf %7, %6 : vector<1x2048xf32>
    %9 = arith.divf %0, %8 : vector<1x2048xf32>
    %c0_3 = arith.constant 0 : index
    %c0_4 = arith.constant 0 : index
    %10 = vector.load %arg4[%c0_3, %c0_4] : memref<1x2048xf32, #tpu.memory_space<vmem>>, vector<1x2048xf32>
    tpu.vector_store %arg4[%c0_3, %c0_4], %9 {strides = array<i32>} : memref<1x2048xf32, #tpu.memory_space<vmem>>, vector<1x2048xf32>,
    return
  }
  func.func @transform_0(%arg0: i32, %arg1: i32) -> i32 {
    %c0_i32 = arith.constant 0 : i32
    %c0_i32_0 = arith.constant 0 : i32
    return %c0_i32 : i32
  }
  func.func @transform_1(%arg0: i32, %arg1: i32) -> (i32, i32) {
    %c0_i32 = arith.constant 0 : i32
    return %arg0, %arg1 : i32, i32
  }
  func.func @transform_2(%arg0: i32, %arg1: i32) -> (i32, i32) {
    %c0_i32 = arith.constant 0 : i32
    return %arg0, %arg1 : i32, i32
  }
}

</mosaic_0001>

<llo_original>
// kernel: tpu_custom_call.1
$region0: #{tpu_custom_call.1}
  #allocation0 [shape = 'u32[]', space=smem, size = 0x4, offset = 0x4, fixed_abs, tag = 'smem constant byte address 0x4 - core index']
  #allocation1 [shape = 'u32[144,128]{1,0:T(1,128)}', space=vmem, size = 0x12000, scoped, tag = 'internal scratch']
  #allocation2 [shape = 'f32[1]{0:T(128)S(6)}', space=smem, size = 0x200, scoped, tag = 'scoped memory for tpu_custom_call.1']
  %s0 = inlined_call_operand.<no memory space> [shape: f32[1], index: 0, kind: input, shape index: {}]
  %s1 = inlined_call_operand.hbm [shape: f32[1,2048], index: 1, kind: input, shape index: {}]
  %s2 = inlined_call_operand.hbm [shape: f32[1,2048], index: 2, kind: output, shape index: {}]
  %s3 = sld [smem:[#allocation0]]
  $region22: #{tpu_custom_call.1} parent=0
    _
  %s5 = ssub.s32 1, %s3
  %s6 = scalar_select 0, %s5, %s3
  %7 = sst [smem:[#allocation2]] %s0
  $region1: #{tpu_custom_call.1} parent=0
    #allocation3 [shape = 'u8[8192]{0}', space=vmem, size = 0x2000, scoped, tag = 'input window, operand 1, single buffered']
    #allocation4 [shape = 's32[1]{0}', space=sflag, size = 0x4, scoped, tag = 'scoped memory for tpu_custom_call.1']
    #allocation5 [shape = 's32[1]{0}', space=sflag, size = 0x4, scoped, tag = 'scoped memory for tpu_custom_call.1']
    #allocation6 [shape = 'u8[8192]{0}', space=vmem, size = 0x2000, scoped, tag = 'output window, operand 0, single buffered']
    %8 = vsyncpa [#allocation4], 0
    %9 = vsyncpa [#allocation5], 0
    // Predicated region
    $region2: #{tpu_custom_call.1} parent=1 // pred_check
      _
    $region3: #{tpu_custom_call.1} parent=1 // pred_check_branch
      %11 = sbr.rel (0) target = $region5
    $region4: #{tpu_custom_call.1} parent=1 // pred_region
      _
    $region5: #{tpu_custom_call.1} parent=1 // pred_fallthru
      _
    // Predicated region
    $region6: #{tpu_custom_call.1} parent=1 // pred_check
      _
    $region7: #{tpu_custom_call.1} parent=1 // pred_check_branch
      %13 = sbr.rel (0) target = $region9
    $region8: #{tpu_custom_call.1} parent=1 // pred_region
      %s15 = ssub.s32 256, 256
      %16 = vsyncadd [#allocation4], %s15
      %s18 = sshll.u32 [#allocation3], 4
      %s19 = int_to_ptr.vmem [resolvable:$true] %s18
      %21 = dma.hbm_to_vmem [thread:$0]  %s1, 256, %s19, [#allocation4]
    $region9: #{tpu_custom_call.1} parent=1 // pred_fallthru
      _
    // Predicated region
    $region10: #{tpu_custom_call.1} parent=1 // pred_check
      _
    $region11: #{tpu_custom_call.1} parent=1 // pred_check_branch
      %23 = sbr.rel (0) target = $region13
    $region12: #{tpu_custom_call.1} parent=1 // pred_region
      %24 = dma.done [#allocation4], 256
    $region13: #{tpu_custom_call.1} parent=1 // pred_fallthru
      _
    %v25 = vld [vmem:[#allocation3] sm:$0xff]
    %v26 = vld [vmem:[#allocation3 + $0x8] sm:$0xff]
    %s27 = sld [smem:[#allocation2]]
    %v28 = vstv %s27
    %v29 = vmul.f32 %v28, %v25
    %v30 = vmul.f32 %v28, %v26
    %v31 = vsub.f32 0.0, %v29
    %v32 = vsub.f32 0.0, %v30
    %v33 = vmul.f32 %v31, 1.442695
    %v34 = vpow.pop %v33
    %v35 = vmul.f32 %v32, 1.442695
    %v36 = vpow.pop %v35
    %v37 = vadd.f32 %v34, 1.0
    %v38 = vadd.f32 %v36, 1.0
    %v39 = vrcp.pop %v37
    %v40 = vmul.f32 %v25, %v39
    %v41 = vrcp.pop %v38
    %v42 = vmul.f32 %v26, %v41
    %43 = vst [vmem:[#allocation6] sm:$0xff] %v40
    %44 = vst [vmem:[#allocation6 + $0x8] sm:$0xff] %v42
    // Predicated region
    $region14: #{tpu_custom_call.1} parent=1 // pred_check
      _
    $region15: #{tpu_custom_call.1} parent=1 // pred_check_branch
      %46 = sbr.rel (0) target = $region17
    $region16: #{tpu_custom_call.1} parent=1 // pred_region
      %s48 = ssub.s32 256, 256
      %49 = vsyncadd [#allocation5], %s48
      %s51 = sshll.u32 [#allocation6], 4
      %s52 = int_to_ptr.vmem [resolvable:$true] %s51
      %54 = dma.vmem_to_hbm [thread:$0]  %s52, 256, %s2, [#allocation5]
    $region17: #{tpu_custom_call.1} parent=1 // pred_fallthru
      _
    // Predicated region
    $region18: #{tpu_custom_call.1} parent=1 // pred_check
      _
    $region19: #{tpu_custom_call.1} parent=1 // pred_check_branch
      %56 = sbr.rel (0) target = $region21
    $region20: #{tpu_custom_call.1} parent=1 // pred_region
      %57 = dma.done [#allocation5], 256
    $region21: #{tpu_custom_call.1} parent=1 // pred_fallthru
      _
    %58 = vsyncpa [#allocation4], 1
    %59 = vsyncpa [#allocation5], 1

</llo_original>
